<compile_context>
chip_gen: v5e
topology: v5e:2x2
jax: 0.10.0
libtpu: 0.0.40
codegen_flags: <defaults>
</compile_context>

<pallas_src>
import functools

import jax
import jax.numpy as jnp
from jax.experimental import pallas as pl
from jax.experimental.pallas import tpu as pltpu


def _round_up(x, m):
    return ((x + m - 1) // m) * m


def _linear_kernel(x_ref, w_ref, b_ref, o_ref, *, precision):
    # x_ref: (TB, D) VMEM (streamed over batch)
    # w_ref: (D, O)  VMEM (resident across the whole grid)
    # b_ref: (1, O)  VMEM (resident)
    # o_ref: (TB, O) VMEM
    acc = jnp.dot(x_ref[...], w_ref[...],
                  preferred_element_type=jnp.float32,
                  precision=precision)
    o_ref[...] = (acc + b_ref[...].astype(jnp.float32)).astype(o_ref.dtype)


def net_forward(embeddings, weight, bias, text_embedding_dim=768,
                block_rows=2048, precision=None):
    """Forward of Net.

    embeddings: (..., D) — flattened to (-1, D) like x.view(-1, D)
    weight:     (O, D)   — nn.Linear weight (native PyTorch layout)
    bias:       (O,)
    precision:  optional lax.Precision for exact fp32 parity with PyTorch.
    """
    out_dtype = embeddings.dtype
    x = embeddings.reshape(-1, text_embedding_dim)
    B, D = x.shape
    O = weight.shape[0]

    # One-time tiny transpose (O x D -> D x O) so the in-kernel contraction is
    # the standard MK x KN orientation (no per-step weight re-layout).
    w_t = weight.T                      # (D, O)
    b2 = bias.reshape(1, O)

    # Dtype-aware sublane rounding: 8 rows for 4-byte, 16 for 2-byte, 32 for
    # 1-byte element types.
    itemsize = jnp.dtype(x.dtype).itemsize
    sublane = max(8, 32 // max(itemsize, 1))
    TB = min(_round_up(block_rows, sublane), _round_up(max(B, 1), sublane))

    grid = (pl.cdiv(B, TB),)            # ragged tail clipped by Pallas

    x_item = itemsize
    w_item = jnp.dtype(w_t.dtype).itemsize
    o_item = jnp.dtype(out_dtype).itemsize
    cost = pl.CostEstimate(
        flops=2 * B * D * O,
        transcendentals=0,
        bytes_accessed=B * D * x_item + D * O * w_item + B * O * o_item)

    out = pl.pallas_call(
        functools.partial(_linear_kernel, precision=precision),
        out_shape=jax.ShapeDtypeStruct((B, O), out_dtype),
        grid=grid,
        in_specs=[
            pl.BlockSpec((TB, D), lambda i: (i, 0)),   # x: streamed over batch
            pl.BlockSpec((D, O), lambda i: (0, 0)),    # W^T: resident
            pl.BlockSpec((1, O), lambda i: (0, 0)),    # b: resident
        ],
        out_specs=pl.BlockSpec((TB, O), lambda i: (i, 0)),
        compiler_params=pltpu.CompilerParams(
            dimension_semantics=("parallel",),         # megacore on v7x
            vmem_limit_bytes=40 * 1024 * 1024),
        cost_estimate=cost,
    )(x, w_t, b2)

    return out


if __name__ == "__main__":
    key = jax.random.PRNGKey(0)
    k_x, k_w, k_b, k_x2 = jax.random.split(key, 4)

    output_dim = 2
    text_embedding_dim = 768

    # Deterministic synthetic parameters (matching nn.Linear shapes).
    bound = 1.0 / (text_embedding_dim ** 0.5)
    weight = jax.random.uniform(
        k_w, (output_dim, text_embedding_dim), jnp.float32, -bound, bound)
    bias = jax.random.uniform(k_b, (output_dim,), jnp.float32, -bound, bound)

    # Test 1: features['embeddings'] with a leading structure, exercising the
    # view(-1, D) flatten and the clipped (B=12 < TB=16) single-block path.
    embeddings = jax.random.normal(
        k_x, (4, 3, text_embedding_dim), jnp.float32)
    out = net_forward(embeddings, weight, bias, text_embedding_dim)
    out = jax.block_until_ready(out)

    x_flat = embeddings.reshape(-1, text_embedding_dim)
    ref = jnp.dot(x_flat, weight.T, precision=jax.lax.Precision.HIGHEST) + bias
    assert out.shape == (12, output_dim)
    assert jnp.allclose(out, ref, atol=2e-4, rtol=2e-4)

    # Test 2: multi-tile grid with a ragged tail and no wrapper-side padding
    # (1100 rows, TB=256 -> grid=(5,), last block covers rows 1024..1099).
    embeddings2 = jax.random.normal(
        k_x2, (1100, text_embedding_dim), jnp.float32)
    out2 = net_forward(embeddings2, weight, bias, text_embedding_dim,
                       block_rows=256)
    out2 = jax.block_until_ready(out2)

    ref2 = jnp.dot(embeddings2, weight.T,
                   precision=jax.lax.Precision.HIGHEST) + bias
    assert out2.shape == (1100, output_dim)
    assert jnp.allclose(out2, ref2, atol=2e-4, rtol=2e-4)

    print("KERNEL_OK")
</pallas_src>

<mosaic_0001>
module attributes {stable_mosaic.version = 11 : i64} {
  func.func @_linear_kernel(%arg0: i32, %arg1: memref<16x768xf32, #tpu.memory_space<vmem>>, %arg2: memref<768x2xf32, #tpu.memory_space<vmem>>, %arg3: memref<1x2xf32, #tpu.memory_space<vmem>>, %arg4: memref<16x2xf32, #tpu.memory_space<vmem>>) attributes {dimension_semantics = [#tpu.dimension_semantics<parallel>], iteration_bounds = array<i64: 1>, scalar_prefetch = 0 : i64, scratch_operands = 0 : i64, tpu.core_type = #tpu.core_type<tc>, window_params = [{transform_indices = @transform_0, window_bounds = array<i64: 16, 768>}, {pipeline_mode = #tpu.pipeline_mode<synchronous>, transform_indices = @transform_1, window_bounds = array<i64: 768, 2>}, {pipeline_mode = #tpu.pipeline_mode<synchronous>, transform_indices = @transform_2, window_bounds = array<i64: 1, 2>}, {transform_indices = @transform_3, window_bounds = array<i64: 16, 2>}]} {
    %c0 = arith.constant 0 : index
    %c0_0 = arith.constant 0 : index
    %0 = vector.load %arg1[%c0, %c0_0] : memref<16x768xf32, #tpu.memory_space<vmem>>, vector<16x768xf32>
    %c0_1 = arith.constant 0 : index
    %c0_2 = arith.constant 0 : index
    %1 = vector.load %arg2[%c0_1, %c0_2] : memref<768x2xf32, #tpu.memory_space<vmem>>, vector<768x2xf32>
    %cst = arith.constant dense<0.000000e+00> : vector<16x2xf32>
    %2 = tpu.matmul %0, %1, %cst {dimension_numbers = #tpu.dot_dimension_numbers<[1], [0], [0], [1], [0, 0, 1, 1], [], []>} : vector<16x768xf32>, vector<768x2xf32>, vector<16x2xf32> -> vector<16x2xf32>
    %c0_3 = arith.constant 0 : index
    %c0_4 = arith.constant 0 : index
    %3 = vector.load %arg3[%c0_3, %c0_4] : memref<1x2xf32, #tpu.memory_space<vmem>>, vector<1x2xf32>
    %4 = vector.broadcast %3 : vector<1x2xf32> to vector<16x2xf32>
    %5 = arith.addf %2, %4 : vector<16x2xf32>
    %c0_5 = arith.constant 0 : index
    %c0_6 = arith.constant 0 : index
    %6 = vector.load %arg4[%c0_5, %c0_6] : memref<16x2xf32, #tpu.memory_space<vmem>>, vector<16x2xf32>
    tpu.vector_store %arg4[%c0_5, %c0_6], %5 {strides = array<i32>} : memref<16x2xf32, #tpu.memory_space<vmem>>, vector<16x2xf32>,
    return
  }
  func.func @transform_0(%arg0: i32) -> (i32, i32) {
    %c0_i32 = arith.constant 0 : i32
    %c0_i32_0 = arith.constant 0 : i32
    return %arg0, %c0_i32 : i32, i32
  }
  func.func @transform_1(%arg0: i32) -> (i32, i32) {
    %c0_i32 = arith.constant 0 : i32
    %c0_i32_0 = arith.constant 0 : i32
    %c0_i32_1 = arith.constant 0 : i32
    return %c0_i32, %c0_i32_0 : i32, i32
  }
  func.func @transform_2(%arg0: i32) -> (i32, i32) {
    %c0_i32 = arith.constant 0 : i32
    %c0_i32_0 = arith.constant 0 : i32
    %c0_i32_1 = arith.constant 0 : i32
    return %c0_i32, %c0_i32_0 : i32, i32
  }
  func.func @transform_3(%arg0: i32) -> (i32, i32) {
    %c0_i32 = arith.constant 0 : i32
    %c0_i32_0 = arith.constant 0 : i32
    return %arg0, %c0_i32 : i32, i32
  }
}

</mosaic_0001>

<llo_original>
// kernel: tpu_custom_call.1
$region0: #{tpu_custom_call.1}
  #allocation0 [shape = 'u32[]', space=smem, size = 0x4, offset = 0x4, fixed_abs, tag = 'smem constant byte address 0x4 - core index']
  #allocation1 [shape = 'u32[72,128]{1,0:T(1,128)}', space=vmem, size = 0x9000, scoped, tag = 'internal scratch']
  %s0 = inlined_call_operand.vmem [shape: f32[12,768], index: 0, kind: input, shape index: {}]
  %s1 = inlined_call_operand.vmem [shape: f32[768,2], index: 1, kind: input, shape index: {}]
  %s2 = inlined_call_operand.vmem [shape: f32[1,2], index: 2, kind: input, shape index: {}]
  %s3 = inlined_call_operand.vmem [shape: f32[12,2], index: 3, kind: output, shape index: {}]
  %s4 = sld [smem:[#allocation0]]
  $region22: #{tpu_custom_call.1} parent=0
    _
  %s6 = ssub.s32 1, %s4
  %s7 = scalar_select 0, %s6, %s4
  // Predicated region
  $region2: #{tpu_custom_call.1} parent=0 // pred_check
    _
  $region3: #{tpu_custom_call.1} parent=0 // pred_check_branch
    %9 = sbr.rel (0) target = $region5
  $region4: #{tpu_custom_call.1} parent=0 // pred_region
    _
  $region5: #{tpu_custom_call.1} parent=0 // pred_fallthru
    _
  // Predicated region
  $region6: #{tpu_custom_call.1} parent=0 // pred_check
    _
  $region7: #{tpu_custom_call.1} parent=0 // pred_check_branch
    %11 = sbr.rel (0) target = $region9
  $region8: #{tpu_custom_call.1} parent=0 // pred_region
    _
  $region9: #{tpu_custom_call.1} parent=0 // pred_fallthru
    _
  // Predicated region
  $region10: #{tpu_custom_call.1} parent=0 // pred_check
    _
  $region11: #{tpu_custom_call.1} parent=0 // pred_check_branch
    %13 = sbr.rel (0) target = $region13
  $region12: #{tpu_custom_call.1} parent=0 // pred_region
    _
  $region13: #{tpu_custom_call.1} parent=0 // pred_fallthru
    _
  %v14 = vld [vmem:[%s0] sm:$0xff]
  %v15 = vld [vmem:[%s0 + $0x8] sm:$0xff]
  %v16 = vld [vmem:[%s0 + $0x10] sm:$0xff]
  %v17 = vld [vmem:[%s0 + $0x18] sm:$0xff]
  %v18 = vld [vmem:[%s0 + $0x20] sm:$0xff]
  %v19 = vld [vmem:[%s0 + $0x28] sm:$0xff]
  %v20 = vld [vmem:[%s0 + $0x30] sm:$0xff]
  %v21 = vld [vmem:[%s0 + $0x38] sm:$0xff]
  %v22 = vld [vmem:[%s0 + $0x40] sm:$0xff]
  %v23 = vld [vmem:[%s0 + $0x48] sm:$0xff]
  %v24 = vld [vmem:[%s0 + $0x50] sm:$0xff]
  %v25 = vld [vmem:[%s0 + $0x58] sm:$0xff]
  %v26 = vld [vmem:[%s1] sm:$0xff]
  %v27 = vld [vmem:[%s1 + $0x8] sm:$0xff]
  %v28 = vld [vmem:[%s1 + $0x10] sm:$0xff]
  %v29 = vld [vmem:[%s1 + $0x18] sm:$0xff]
  %v30 = vld [vmem:[%s1 + $0x20] sm:$0xff]
  %v31 = vld [vmem:[%s1 + $0x28] sm:$0xff]
  %v32 = vld [vmem:[%s1 + $0x30] sm:$0xff]
  %v33 = vld [vmem:[%s1 + $0x38] sm:$0xff]
  %v34 = vld [vmem:[%s1 + $0x40] sm:$0xff]
  %v35 = vld [vmem:[%s1 + $0x48] sm:$0xff]
  %v36 = vld [vmem:[%s1 + $0x50] sm:$0xff]
  %v37 = vld [vmem:[%s1 + $0x58] sm:$0xff]
  %v38 = vld [vmem:[%s1 + $0x60] sm:$0xff]
  %v39 = vld [vmem:[%s1 + $0x68] sm:$0xff]
  %v40 = vld [vmem:[%s1 + $0x70] sm:$0xff]
  %v41 = vld [vmem:[%s1 + $0x78] sm:$0xff]
  %v42 = vld [vmem:[%s1 + $0x80] sm:$0xff]
  %v43 = vld [vmem:[%s1 + $0x88] sm:$0xff]
  %v44 = vld [vmem:[%s1 + $0x90] sm:$0xff]
  %v45 = vld [vmem:[%s1 + $0x98] sm:$0xff]
  %v46 = vld [vmem:[%s1 + $0xa0] sm:$0xff]
  %v47 = vld [vmem:[%s1 + $0xa8] sm:$0xff]
  %v48 = vld [vmem:[%s1 + $0xb0] sm:$0xff]
  %v49 = vld [vmem:[%s1 + $0xb8] sm:$0xff]
  %v50 = vld [vmem:[%s1 + $0xc0] sm:$0xff]
  %v51 = vld [vmem:[%s1 + $0xc8] sm:$0xff]
  %v52 = vld [vmem:[%s1 + $0xd0] sm:$0xff]
  %v53 = vld [vmem:[%s1 + $0xd8] sm:$0xff]
  %v54 = vld [vmem:[%s1 + $0xe0] sm:$0xff]
  %v55 = vld [vmem:[%s1 + $0xe8] sm:$0xff]
  %v56 = vld [vmem:[%s1 + $0xf0] sm:$0xff]
  %v57 = vld [vmem:[%s1 + $0xf8] sm:$0xff]
  %v58 = vld [vmem:[%s1 + $0x100] sm:$0xff]
  %v59 = vld [vmem:[%s1 + $0x108] sm:$0xff]
  %v60 = vld [vmem:[%s1 + $0x110] sm:$0xff]
  %v61 = vld [vmem:[%s1 + $0x118] sm:$0xff]
  %v62 = vld [vmem:[%s1 + $0x120] sm:$0xff]
  %v63 = vld [vmem:[%s1 + $0x128] sm:$0xff]
  %v64 = vld [vmem:[%s1 + $0x130] sm:$0xff]
  %v65 = vld [vmem:[%s1 + $0x138] sm:$0xff]
  %v66 = vld [vmem:[%s1 + $0x140] sm:$0xff]
  %v67 = vld [vmem:[%s1 + $0x148] sm:$0xff]
  %v68 = vld [vmem:[%s1 + $0x150] sm:$0xff]
  %v69 = vld [vmem:[%s1 + $0x158] sm:$0xff]
  %v70 = vld [vmem:[%s1 + $0x160] sm:$0xff]
  %v71 = vld [vmem:[%s1 + $0x168] sm:$0xff]
  %v72 = vld [vmem:[%s1 + $0x170] sm:$0xff]
  %v73 = vld [vmem:[%s1 + $0x178] sm:$0xff]
  %v74 = vld [vmem:[%s1 + $0x180] sm:$0xff]
  %v75 = vld [vmem:[%s1 + $0x188] sm:$0xff]
  %v76 = vld [vmem:[%s1 + $0x190] sm:$0xff]
  %v77 = vld [vmem:[%s1 + $0x198] sm:$0xff]
  %v78 = vld [vmem:[%s1 + $0x1a0] sm:$0xff]
  %v79 = vld [vmem:[%s1 + $0x1a8] sm:$0xff]
  %v80 = vld [vmem:[%s1 + $0x1b0] sm:$0xff]
  %v81 = vld [vmem:[%s1 + $0x1b8] sm:$0xff]
  %v82 = vld [vmem:[%s1 + $0x1c0] sm:$0xff]
  %v83 = vld [vmem:[%s1 + $0x1c8] sm:$0xff]
  %v84 = vld [vmem:[%s1 + $0x1d0] sm:$0xff]
  %v85 = vld [vmem:[%s1 + $0x1d8] sm:$0xff]
  %v86 = vld [vmem:[%s1 + $0x1e0] sm:$0xff]
  %v87 = vld [vmem:[%s1 + $0x1e8] sm:$0xff]
  %v88 = vld [vmem:[%s1 + $0x1f0] sm:$0xff]
  %v89 = vld [vmem:[%s1 + $0x1f8] sm:$0xff]
  %v90 = vld [vmem:[%s1 + $0x200] sm:$0xff]
  %v91 = vld [vmem:[%s1 + $0x208] sm:$0xff]
  %v92 = vld [vmem:[%s1 + $0x210] sm:$0xff]
  %v93 = vld [vmem:[%s1 + $0x218] sm:$0xff]
  %v94 = vld [vmem:[%s1 + $0x220] sm:$0xff]
  %v95 = vld [vmem:[%s1 + $0x228] sm:$0xff]
  %v96 = vld [vmem:[%s1 + $0x230] sm:$0xff]
  %v97 = vld [vmem:[%s1 + $0x238] sm:$0xff]
  %v98 = vld [vmem:[%s1 + $0x240] sm:$0xff]
  %v99 = vld [vmem:[%s1 + $0x248] sm:$0xff]
  %v100 = vld [vmem:[%s1 + $0x250] sm:$0xff]
  %v101 = vld [vmem:[%s1 + $0x258] sm:$0xff]
  %v102 = vld [vmem:[%s1 + $0x260] sm:$0xff]
  %v103 = vld [vmem:[%s1 + $0x268] sm:$0xff]
  %v104 = vld [vmem:[%s1 + $0x270] sm:$0xff]
  %v105 = vld [vmem:[%s1 + $0x278] sm:$0xff]
  %v106 = vld [vmem:[%s1 + $0x280] sm:$0xff]
  %v107 = vld [vmem:[%s1 + $0x288] sm:$0xff]
  %v108 = vld [vmem:[%s1 + $0x290] sm:$0xff]
  %v109 = vld [vmem:[%s1 + $0x298] sm:$0xff]
  %v110 = vld [vmem:[%s1 + $0x2a0] sm:$0xff]
  %v111 = vld [vmem:[%s1 + $0x2a8] sm:$0xff]
  %v112 = vld [vmem:[%s1 + $0x2b0] sm:$0xff]
  %v113 = vld [vmem:[%s1 + $0x2b8] sm:$0xff]
  %v114 = vld [vmem:[%s1 + $0x2c0] sm:$0xff]
  %v115 = vld [vmem:[%s1 + $0x2c8] sm:$0xff]
  %v116 = vld [vmem:[%s1 + $0x2d0] sm:$0xff]
  %v117 = vld [vmem:[%s1 + $0x2d8] sm:$0xff]
  %v118 = vld [vmem:[%s1 + $0x2e0] sm:$0xff]
  %v119 = vld [vmem:[%s1 + $0x2e8] sm:$0xff]
  %v120 = vld [vmem:[%s1 + $0x2f0] sm:$0xff]
  %v121 = vld [vmem:[%s1 + $0x2f8] sm:$0xff]
  %v122 = vld [vmem:[%s2] sm:$0x1]
  %v124 = vperm.slane %v122, 0
  %126 = vmatpush.msra.mxu0 %v41
  %127 = vmatpush.msra.mxu0 %v40
  %128 = vmatpush.msra.mxu0 %v39
  %129 = vmatpush.msra.mxu0 %v38
  %130 = vmatpush.msra.mxu0 %v37
  %131 = vmatpush.msra.mxu0 %v36
  %132 = vmatpush.msra.mxu0 %v35
  %133 = vmatpush.msra.mxu0 %v34
  %134 = vmatpush.msra.mxu0 %v33
  %135 = vmatpush.msra.mxu0 %v32
  %136 = vmatpush.msra.mxu0 %v31
  %137 = vmatpush.msra.mxu0 %v30
  %138 = vmatpush.msra.mxu0 %v29
  %139 = vmatpush.msra.mxu0 %v28
  %140 = vmatpush.msra.mxu0 %v27
  %141 = vmatpush.msra.mxu0 %v26
  %142 = vmatmul.f32.gmra.mxu0 %v14
  %v143 = vpop.f32.mrf.mxu0
  %v144 = vadd.f32 %v124, %v143
  %145 = vmatmul.f32.gmra.mxu0 %v20
  %v146 = vpop.f32.mrf.mxu0
  %v147 = vadd.f32 %v124, %v146
  %148 = vdwg.mxu0
  %149 = vmatpush.msra.mxu0 %v57
  %150 = vmatpush.msra.mxu0 %v56
  %151 = vmatpush.msra.mxu0 %v55
  %152 = vmatpush.msra.mxu0 %v54
  %153 = vmatpush.msra.mxu0 %v53
  %154 = vmatpush.msra.mxu0 %v52
  %155 = vmatpush.msra.mxu0 %v51
  %156 = vmatpush.msra.mxu0 %v50
  %157 = vmatpush.msra.mxu0 %v49
  %158 = vmatpush.msra.mxu0 %v48
  %159 = vmatpush.msra.mxu0 %v47
  %160 = vmatpush.msra.mxu0 %v46
  %161 = vmatpush.msra.mxu0 %v45
  %162 = vmatpush.msra.mxu0 %v44
  %163 = vmatpush.msra.mxu0 %v43
  %164 = vmatpush.msra.mxu0 %v42
  %165 = vmatmul.f32.gmra.mxu0 %v15
  %v166 = vpop.f32.mrf.mxu0
  %v167 = vadd.f32 %v144, %v166
  %168 = vmatmul.f32.gmra.mxu0 %v21
  %v169 = vpop.f32.mrf.mxu0
  %v170 = vadd.f32 %v147, %v169
  %171 = vdwg.mxu0
  %172 = vmatpush.msra.mxu0 %v73
  %173 = vmatpush.msra.mxu0 %v72
  %174 = vmatpush.msra.mxu0 %v71
  %175 = vmatpush.msra.mxu0 %v70
  %176 = vmatpush.msra.mxu0 %v69
  %177 = vmatpush.msra.mxu0 %v68
  %178 = vmatpush.msra.mxu0 %v67
  %179 = vmatpush.msra.mxu0 %v66
  %180 = vmatpush.msra.mxu0 %v65
  %181 = vmatpush.msra.mxu0 %v64
  %182 = vmatpush.msra.mxu0 %v63
  %183 = vmatpush.msra.mxu0 %v62
  %184 = vmatpush.msra.mxu0 %v61
  %185 = vmatpush.msra.mxu0 %v60
  %186 = vmatpush.msra.mxu0 %v59
  %187 = vmatpush.msra.mxu0 %v58
  %188 = vmatmul.f32.gmra.mxu0 %v16
  %v189 = vpop.f32.mrf.mxu0
  %v190 = vadd.f32 %v167, %v189
  %191 = vmatmul.f32.gmra.mxu0 %v22
  %v192 = vpop.f32.mrf.mxu0
  %v193 = vadd.f32 %v170, %v192
  %194 = vdwg.mxu0
  %195 = vmatpush.msra.mxu0 %v89
  %196 = vmatpush.msra.mxu0 %v88
  %197 = vmatpush.msra.mxu0 %v87
  %198 = vmatpush.msra.mxu0 %v86
  %199 = vmatpush.msra.mxu0 %v85
  %200 = vmatpush.msra.mxu0 %v84
  %201 = vmatpush.msra.mxu0 %v83
  %202 = vmatpush.msra.mxu0 %v82
  %203 = vmatpush.msra.mxu0 %v81
  %204 = vmatpush.msra.mxu0 %v80
  %205 = vmatpush.msra.mxu0 %v79
  %206 = vmatpush.msra.mxu0 %v78
  %207 = vmatpush.msra.mxu0 %v77
  %208 = vmatpush.msra.mxu0 %v76
  %209 = vmatpush.msra.mxu0 %v75
  %210 = vmatpush.msra.mxu0 %v74
  %211 = vmatmul.f32.gmra.mxu0 %v17
  %v212 = vpop.f32.mrf.mxu0
  %v213 = vadd.f32 %v190, %v212
  %214 = vmatmul.f32.gmra.mxu0 %v23
  %v215 = vpop.f32.mrf.mxu0
  %v216 = vadd.f32 %v193, %v215
  %217 = vdwg.mxu0
  %218 = vmatpush.msra.mxu0 %v105
  %219 = vmatpush.msra.mxu0 %v104
  %220 = vmatpush.msra.mxu0 %v103
  %221 = vmatpush.msra.mxu0 %v102
  %222 = vmatpush.msra.mxu0 %v101
  %223 = vmatpush.msra.mxu0 %v100
  %224 = vmatpush.msra.mxu0 %v99
  %225 = vmatpush.msra.mxu0 %v98
  %226 = vmatpush.msra.mxu0 %v97
  %227 = vmatpush.msra.mxu0 %v96
  %228 = vmatpush.msra.mxu0 %v95
  %229 = vmatpush.msra.mxu0 %v94
  %230 = vmatpush.msra.mxu0 %v93
  %231 = vmatpush.msra.mxu0 %v92
  %232 = vmatpush.msra.mxu0 %v91
  %233 = vmatpush.msra.mxu0 %v90
  %234 = vmatmul.f32.gmra.mxu0 %v18
  %v235 = vpop.f32.mrf.mxu0
  %v236 = vadd.f32 %v213, %v235
  %237 = vmatmul.f32.gmra.mxu0 %v24
  %v238 = vpop.f32.mrf.mxu0
  %v239 = vadd.f32 %v216, %v238
  %240 = vdwg.mxu0
  %241 = vmatpush.msra.mxu0 %v121
  %242 = vmatpush.msra.mxu0 %v120
  %243 = vmatpush.msra.mxu0 %v119
  %244 = vmatpush.msra.mxu0 %v118
  %245 = vmatpush.msra.mxu0 %v117
  %246 = vmatpush.msra.mxu0 %v116
  %247 = vmatpush.msra.mxu0 %v115
  %248 = vmatpush.msra.mxu0 %v114
  %249 = vmatpush.msra.mxu0 %v113
  %250 = vmatpush.msra.mxu0 %v112
  %251 = vmatpush.msra.mxu0 %v111
  %252 = vmatpush.msra.mxu0 %v110
  %253 = vmatpush.msra.mxu0 %v109
  %254 = vmatpush.msra.mxu0 %v108
  %255 = vmatpush.msra.mxu0 %v107
  %256 = vmatpush.msra.mxu0 %v106
  %257 = vmatmul.f32.gmra.mxu0 %v19
  %v258 = vpop.f32.mrf.mxu0
  %v259 = vadd.f32 %v236, %v258
  %260 = vmatmul.f32.gmra.mxu0 %v25
  %v261 = vpop.f32.mrf.mxu0
  %v262 = vadd.f32 %v239, %v261
  %263 = vdwg.mxu0
  %vm264 = vcmask 15360
  %265 = vst.msk [vmem:[%s3] sm:$0xff] %vm264, %v259
  %266 = vst.msk [vmem:[%s3 + $0x8] sm:$0xff] %vm264, %v262
  // Predicated region
  $region14: #{tpu_custom_call.1} parent=0 // pred_check
    _
  $region15: #{tpu_custom_call.1} parent=0 // pred_check_branch
    %268 = sbr.rel (0) target = $region17
  $region16: #{tpu_custom_call.1} parent=0 // pred_region
    _
  $region17: #{tpu_custom_call.1} parent=0 // pred_fallthru
    _
  // Predicated region
  $region18: #{tpu_custom_call.1} parent=0 // pred_check
    _
  $region19: #{tpu_custom_call.1} parent=0 // pred_check_branch
    %270 = sbr.rel (0) target = $region21
  $region20: #{tpu_custom_call.1} parent=0 // pred_region
    _
  $region21: #{tpu_custom_call.1} parent=0 // pred_fallthru
    _

</llo_original>
